<compile_context>
chip_gen: v5e
topology: v5e:2x2
jax: 0.10.0
libtpu: 0.0.40
codegen_flags: <defaults>
</compile_context>

<pallas_src>
import functools

import jax
import jax.numpy as jnp
import numpy as np
from jax import lax
from jax.experimental import pallas as pl
from jax.experimental.pallas import tpu as pltpu

SMOOTH = 1.0
EPS = 1e-6

_LANE = 128
_MAX_TILE_R = 1024  # row-tile cap: bounds VMEM for very large N*C


def _device_defaults():
    """Per-generation streaming defaults (block bytes, buffering, core split)."""
    kind = ""
    try:
        kind = jax.devices()[0].device_kind.lower()
    except Exception:
        pass
    if "v7" in kind:
        # 2 TensorCores, 64 MiB VMEM/TC, 3.2 TB/s HBM: keep blocks at ~4 MiB,
        # go deeper on buffering, and shard the stream across both cores.
        return dict(n_split=2, target_block_bytes=4 << 20, n_buffers=3,
                    vmem_cap=44 << 20)
    # v5e / v6e (single TensorCore, 128 MiB physical VMEM): big blocks,
    # plain double buffering, no core split.
    return dict(n_split=1, target_block_bytes=8 << 20, n_buffers=2,
                vmem_cap=100 << 20)


def _dice_partial_kernel(x_ref, t_ref, inter_ref, denom_ref, *,
                         tile_s, s_steps, s_valid):
    """Accumulate per-row partial sums over the spatial (innermost) grid axis.

    x_ref, t_ref : (TILE_R, TILE_S) input blocks (any dtype, upcast to f32)
    inter_ref    : (TILE_R, 1) resident accumulator: sum(x * t)
    denom_ref    : (TILE_R, 1) resident accumulator: sum(x) + sum(t)
    """
    core = pl.program_id(0)
    s = pl.program_id(2)

    @pl.when(s == 0)
    def _():
        inter_ref[...] = jnp.zeros_like(inter_ref)
        denom_ref[...] = jnp.zeros_like(denom_ref)

    x = x_ref[...].astype(jnp.float32)
    t = t_ref[...].astype(jnp.float32)

    # True (unclamped) global spatial column offset for this step.  Tiles whose
    # window extends past S (the ragged tail, or fully out-of-range tiles that
    # the core split produces) take the masked path; everything else runs the
    # plain, mask-free path.
    col0 = (core * s_steps + s) * tile_s
    is_tail = col0 + tile_s > s_valid

    @pl.when(jnp.logical_not(is_tail))
    def _():
        inter_ref[...] += jnp.sum(x * t, axis=-1, keepdims=True)
        denom_ref[...] += jnp.sum(x + t, axis=-1, keepdims=True)

    @pl.when(is_tail)
    def _():
        lane = lax.broadcasted_iota(jnp.int32, x.shape, 1)
        valid = (col0 + lane) < s_valid
        xm = jnp.where(valid, x, 0.0)
        tm = jnp.where(valid, t, 0.0)
        inter_ref[...] += jnp.sum(xm * tm, axis=-1, keepdims=True)
        denom_ref[...] += jnp.sum(xm + tm, axis=-1, keepdims=True)


def multiclass_dice_loss(inputs, targets, *, n_split=None,
                         target_block_bytes=None, n_buffers=None):
    """inputs, targets: (N, C, ...), same shape. Returns scalar f32 loss."""
    assert inputs.shape == targets.shape, "predict & target shape do not match"
    N, C = inputs.shape[0], inputs.shape[1]
    R = N * C
    S = int(np.prod(inputs.shape[2:])) if inputs.ndim > 2 else 1

    d = _device_defaults()
    n_split = d["n_split"] if n_split is None else n_split
    target_block_bytes = (d["target_block_bytes"] if target_block_bytes is None
                          else target_block_bytes)
    n_buffers = d["n_buffers"] if n_buffers is None else n_buffers
    vmem_cap = d["vmem_cap"]

    x = inputs.reshape(R, S)
    t = targets.reshape(R, S)
    ix = jnp.dtype(x.dtype).itemsize
    it = jnp.dtype(t.dtype).itemsize

    # --- row (R) tiling: bounds VMEM for large N*C ---------------------------
    # Sublane alignment for the narrowest input dtype (f32:8, bf16:16, int8:32).
    row_align = max(8, 32 // min(ix, it))
    if R <= _MAX_TILE_R:
        tile_r = R                                   # full dim: always legal
    else:
        tile_r = (_MAX_TILE_R // row_align) * row_align
    n_r = pl.cdiv(R, tile_r)                         # ragged last block is OK:
    # its junk rows only feed accumulator rows that the masked output store
    # never writes back.

    # --- spatial (S) tiling: dtype-aware, ~target_block_bytes per input block.
    tile_s = target_block_bytes // (tile_r * max(ix, it))
    if tile_s >= S:
        tile_s = S                                   # single spatial tile
    else:
        tile_s = max(_LANE, (tile_s // _LANE) * _LANE)
        if tile_s >= S:
            tile_s = S
    n_s_total = pl.cdiv(S, tile_s)                   # unpadded tile count
    s_steps = pl.cdiv(n_s_total, n_split)            # spatial steps per core

    # --- VMEM budget: n_buffers per input block + tiny f32 accumulators ------
    needed = n_buffers * (ix + it) * tile_r * tile_s + 2 * 2 * 4 * tile_r
    vmem_limit = int(min(vmem_cap, max(32 << 20, needed + (8 << 20))))

    # Clamp fully out-of-range tiles (from the core split) onto the last valid
    # block; the kernel's lane mask zeroes their contribution.
    in_map = lambda c, r, s: (r, jnp.minimum(c * s_steps + s, n_s_total - 1))
    out_map = lambda c, r, s: (c, r, 0)

    def _in_spec():
        if n_buffers != 2:
            try:
                return pl.BlockSpec((tile_r, tile_s), in_map,
                                    pipeline_mode=pl.Buffered(n_buffers))
            except TypeError:
                pass  # older BlockSpec without pipeline_mode: fall back
        return pl.BlockSpec((tile_r, tile_s), in_map)

    kernel = functools.partial(_dice_partial_kernel, tile_s=tile_s,
                               s_steps=s_steps, s_valid=S)

    inter, denom = pl.pallas_call(
        kernel,
        out_shape=(
            jax.ShapeDtypeStruct((n_split, R, 1), jnp.float32),
            jax.ShapeDtypeStruct((n_split, R, 1), jnp.float32),
        ),
        grid_spec=pltpu.PrefetchScalarGridSpec(
            num_scalar_prefetch=0,
            grid=(n_split, n_r, s_steps),
            in_specs=[_in_spec(), _in_spec()],
            out_specs=(
                pl.BlockSpec((None, tile_r, 1), out_map),
                pl.BlockSpec((None, tile_r, 1), out_map),
            ),
        ),
        compiler_params=pltpu.CompilerParams(
            dimension_semantics=("parallel", "parallel", "arbitrary"),
            vmem_limit_bytes=vmem_limit,
        ),
    )(x, t)

    # --- tiny epilogue in plain JAX ------------------------------------------
    inter = jnp.sum(inter[:, :, 0], axis=0).reshape(N, C)   # sum over cores
    denom = jnp.sum(denom[:, :, 0], axis=0).reshape(N, C)
    dice_eff = (2.0 * inter + SMOOTH) / (denom + SMOOTH + EPS)   # (N, C)
    per_class = jnp.mean(1.0 - dice_eff, axis=0)                 # (C,)
    # weight=None, ignore_index=[]  ->  sum over classes / C
    return jnp.sum(per_class) / jnp.float32(C)


def _reference(inputs, targets):
    """Pure-JAX reference mirroring the PyTorch module (weight=None, ignore_index=[])."""
    N, C = inputs.shape[0], inputs.shape[1]
    xf = inputs.reshape(N, C, -1).astype(jnp.float32)
    tf = targets.reshape(N, C, -1).astype(jnp.float32)
    inter = jnp.sum(xf * tf, axis=-1)
    dice = (2.0 * inter + SMOOTH) / (jnp.sum(xf, -1) + jnp.sum(tf, -1) + SMOOTH + EPS)
    per_class = jnp.mean(1.0 - dice, axis=0)
    return jnp.sum(per_class) / C


if __name__ == "__main__":
    key = jax.random.PRNGKey(0)
    k1, k2 = jax.random.split(key)
    N, C, H, W = 2, 4, 16, 16
    logits = jax.random.normal(k1, (N, C, H, W), dtype=jnp.float32)
    preds_f32 = jax.nn.softmax(logits, axis=1)                       # (N,C,H,W)
    labels = jax.random.randint(k2, (N, H, W), 0, C)
    targets_f32 = jax.nn.one_hot(labels, C, axis=1, dtype=jnp.float32)

    # 1) f32 path — exact check against the f32 reference.
    loss = jax.block_until_ready(multiclass_dice_loss(preds_f32, targets_f32))
    ref = jax.block_until_ready(_reference(preds_f32, targets_f32))
    np.testing.assert_allclose(np.asarray(loss), np.asarray(ref), rtol=1e-5, atol=1e-5)

    # 2) reduced-precision path (bf16 preds + bf16 one-hot targets): halves HBM
    #    traffic; reference is computed on the same low-precision inputs.
    preds_bf16 = preds_f32.astype(jnp.bfloat16)
    targets_bf16 = targets_f32.astype(jnp.bfloat16)
    loss_lp = jax.block_until_ready(multiclass_dice_loss(preds_bf16, targets_bf16))
    ref_lp = jax.block_until_ready(_reference(preds_bf16.astype(jnp.float32),
                                              targets_bf16.astype(jnp.float32)))
    np.testing.assert_allclose(np.asarray(loss_lp), np.asarray(ref_lp),
                               rtol=1e-5, atol=1e-5)

    print("KERNEL_OK")
</pallas_src>

<mosaic_0001>
module attributes {stable_mosaic.version = 11 : i64} {
  func.func @_dice_partial_kernel(%arg0: i32, %arg1: i32, %arg2: i32, %arg3: memref<8x256xf32, #tpu.memory_space<vmem>>, %arg4: memref<8x256xf32, #tpu.memory_space<vmem>>, %arg5: memref<1x8x1xf32, #tpu.memory_space<vmem>>, %arg6: memref<1x8x1xf32, #tpu.memory_space<vmem>>) attributes {dimension_semantics = [#tpu.dimension_semantics<parallel>, #tpu.dimension_semantics<parallel>, #tpu.dimension_semantics<arbitrary>], iteration_bounds = array<i64: 1, 1, 1>, scalar_prefetch = 0 : i64, scratch_operands = 0 : i64, tpu.core_type = #tpu.core_type<tc>, window_params = [{transform_indices = @transform_0, window_bounds = array<i64: 8, 256>}, {transform_indices = @transform_1, window_bounds = array<i64: 8, 256>}, {transform_indices = @transform_2, window_bounds = array<i64: 1, 8, 1>}, {transform_indices = @transform_3, window_bounds = array<i64: 1, 8, 1>}]} {
    %c0_i32 = arith.constant 0 : i32
    %0 = arith.cmpi eq, %arg2, %c0_i32 : i32
    %1 = arith.extui %0 : i1 to i32
    %c0_i32_0 = arith.constant 0 : i32
    %2 = arith.cmpi ne, %1, %c0_i32_0 : i32
    scf.if %2 {
      %cst = arith.constant 0.000000e+00 : f32
      %15 = vector.broadcast %cst : f32 to vector<8x1xf32>
      %c0_8 = arith.constant 0 : index
      %c0_9 = arith.constant 0 : index
      %c0_10 = arith.constant 0 : index
      %16 = vector.load %arg5[%c0_8, %c0_9, %c0_10] : memref<1x8x1xf32, #tpu.memory_space<vmem>>, vector<1x8x1xf32>
      %17 = vector.shape_cast %16 : vector<1x8x1xf32> to vector<8x1xf32>
      %18 = vector.shape_cast %15 : vector<8x1xf32> to vector<1x8x1xf32>
      tpu.vector_store %arg5[%c0_8, %c0_9, %c0_10], %18 {strides = array<i32>} : memref<1x8x1xf32, #tpu.memory_space<vmem>>, vector<1x8x1xf32>,
      %cst_11 = arith.constant 0.000000e+00 : f32
      %19 = vector.broadcast %cst_11 : f32 to vector<8x1xf32>
      %c0_12 = arith.constant 0 : index
      %c0_13 = arith.constant 0 : index
      %c0_14 = arith.constant 0 : index
      %20 = vector.load %arg6[%c0_12, %c0_13, %c0_14] : memref<1x8x1xf32, #tpu.memory_space<vmem>>, vector<1x8x1xf32>
      %21 = vector.shape_cast %20 : vector<1x8x1xf32> to vector<8x1xf32>
      %22 = vector.shape_cast %19 : vector<8x1xf32> to vector<1x8x1xf32>
      tpu.vector_store %arg6[%c0_12, %c0_13, %c0_14], %22 {strides = array<i32>} : memref<1x8x1xf32, #tpu.memory_space<vmem>>, vector<1x8x1xf32>,
    } else {
    }
    %c0 = arith.constant 0 : index
    %c0_1 = arith.constant 0 : index
    %3 = vector.load %arg3[%c0, %c0_1] : memref<8x256xf32, #tpu.memory_space<vmem>>, vector<8x256xf32>
    %c0_2 = arith.constant 0 : index
    %c0_3 = arith.constant 0 : index
    %4 = vector.load %arg4[%c0_2, %c0_3] : memref<8x256xf32, #tpu.memory_space<vmem>>, vector<8x256xf32>
    %c1_i32 = arith.constant 1 : i32
    %5 = arith.muli %arg0, %c1_i32 : i32
    %6 = arith.addi %5, %arg2 : i32
    %c256_i32 = arith.constant 256 : i32
    %7 = arith.muli %6, %c256_i32 : i32
    %c256_i32_4 = arith.constant 256 : i32
    %8 = arith.addi %7, %c256_i32_4 : i32
    %c256_i32_5 = arith.constant 256 : i32
    %9 = arith.cmpi sgt, %8, %c256_i32_5 : i32
    %true = arith.constant true
    %10 = arith.xori %9, %true : i1
    %11 = arith.extui %10 : i1 to i32
    %c0_i32_6 = arith.constant 0 : i32
    %12 = arith.cmpi ne, %11, %c0_i32_6 : i32
    scf.if %12 {
      %c0_8 = arith.constant 0 : index
      %c0_9 = arith.constant 0 : index
      %c0_10 = arith.constant 0 : index
      %15 = vector.load %arg5[%c0_8, %c0_9, %c0_10] : memref<1x8x1xf32, #tpu.memory_space<vmem>>, vector<1x8x1xf32>
      %16 = vector.shape_cast %15 : vector<1x8x1xf32> to vector<8x1xf32>
      %17 = arith.mulf %3, %4 : vector<8x256xf32>
      %cst = arith.constant dense<0.000000e+00> : vector<8xf32>
      %18 = vector.multi_reduction <add>, %17, %cst [1] : vector<8x256xf32> to vector<8xf32>
      %19 = vector.shape_cast %18 : vector<8xf32> to vector<8x1xf32>
      %20 = arith.addf %16, %19 : vector<8x1xf32>
      %c0_11 = arith.constant 0 : index
      %c0_12 = arith.constant 0 : index
      %c0_13 = arith.constant 0 : index
      %21 = vector.load %arg5[%c0_11, %c0_12, %c0_13] : memref<1x8x1xf32, #tpu.memory_space<vmem>>, vector<1x8x1xf32>
      %22 = vector.shape_cast %21 : vector<1x8x1xf32> to vector<8x1xf32>
      %23 = vector.shape_cast %20 : vector<8x1xf32> to vector<1x8x1xf32>
      tpu.vector_store %arg5[%c0_11, %c0_12, %c0_13], %23 {strides = array<i32>} : memref<1x8x1xf32, #tpu.memory_space<vmem>>, vector<1x8x1xf32>,
      %c0_14 = arith.constant 0 : index
      %c0_15 = arith.constant 0 : index
      %c0_16 = arith.constant 0 : index
      %24 = vector.load %arg6[%c0_14, %c0_15, %c0_16] : memref<1x8x1xf32, #tpu.memory_space<vmem>>, vector<1x8x1xf32>
      %25 = vector.shape_cast %24 : vector<1x8x1xf32> to vector<8x1xf32>
      %26 = arith.addf %3, %4 : vector<8x256xf32>
      %cst_17 = arith.constant dense<0.000000e+00> : vector<8xf32>
      %27 = vector.multi_reduction <add>, %26, %cst_17 [1] : vector<8x256xf32> to vector<8xf32>
      %28 = vector.shape_cast %27 : vector<8xf32> to vector<8x1xf32>
      %29 = arith.addf %25, %28 : vector<8x1xf32>
      %c0_18 = arith.constant 0 : index
      %c0_19 = arith.constant 0 : index
      %c0_20 = arith.constant 0 : index
      %30 = vector.load %arg6[%c0_18, %c0_19, %c0_20] : memref<1x8x1xf32, #tpu.memory_space<vmem>>, vector<1x8x1xf32>
      %31 = vector.shape_cast %30 : vector<1x8x1xf32> to vector<8x1xf32>
      %32 = vector.shape_cast %29 : vector<8x1xf32> to vector<1x8x1xf32>
      tpu.vector_store %arg6[%c0_18, %c0_19, %c0_20], %32 {strides = array<i32>} : memref<1x8x1xf32, #tpu.memory_space<vmem>>, vector<1x8x1xf32>,
    } else {
    }
    %13 = arith.extui %9 : i1 to i32
    %c0_i32_7 = arith.constant 0 : i32
    %14 = arith.cmpi ne, %13, %c0_i32_7 : i32
    scf.if %14 {
      %15 = tpu.iota {dimensions = array<i32: 1>} : vector<8x256xi32>
      %16 = vector.broadcast %7 : i32 to vector<8x256xi32>
      %17 = arith.addi %16, %15 : vector<8x256xi32>
      %c256_i32_8 = arith.constant 256 : i32
      %18 = vector.broadcast %c256_i32_8 : i32 to vector<8x256xi32>
      %19 = arith.cmpi slt, %17, %18 : vector<8x256xi32>
      %cst = arith.constant 0.000000e+00 : f32
      %20 = vector.broadcast %cst : f32 to vector<8x256xf32>
      %21 = arith.select %19, %3, %20 : vector<8x256xi1>, vector<8x256xf32>
      %cst_9 = arith.constant 0.000000e+00 : f32
      %22 = vector.broadcast %cst_9 : f32 to vector<8x256xf32>
      %23 = arith.select %19, %4, %22 : vector<8x256xi1>, vector<8x256xf32>
      %c0_10 = arith.constant 0 : index
      %c0_11 = arith.constant 0 : index
      %c0_12 = arith.constant 0 : index
      %24 = vector.load %arg5[%c0_10, %c0_11, %c0_12] : memref<1x8x1xf32, #tpu.memory_space<vmem>>, vector<1x8x1xf32>
      %25 = vector.shape_cast %24 : vector<1x8x1xf32> to vector<8x1xf32>
      %26 = arith.mulf %21, %23 : vector<8x256xf32>
      %cst_13 = arith.constant dense<0.000000e+00> : vector<8xf32>
      %27 = vector.multi_reduction <add>, %26, %cst_13 [1] : vector<8x256xf32> to vector<8xf32>
      %28 = vector.shape_cast %27 : vector<8xf32> to vector<8x1xf32>
      %29 = arith.addf %25, %28 : vector<8x1xf32>
      %c0_14 = arith.constant 0 : index
      %c0_15 = arith.constant 0 : index
      %c0_16 = arith.constant 0 : index
      %30 = vector.load %arg5[%c0_14, %c0_15, %c0_16] : memref<1x8x1xf32, #tpu.memory_space<vmem>>, vector<1x8x1xf32>
      %31 = vector.shape_cast %30 : vector<1x8x1xf32> to vector<8x1xf32>
      %32 = vector.shape_cast %29 : vector<8x1xf32> to vector<1x8x1xf32>
      tpu.vector_store %arg5[%c0_14, %c0_15, %c0_16], %32 {strides = array<i32>} : memref<1x8x1xf32, #tpu.memory_space<vmem>>, vector<1x8x1xf32>,
      %c0_17 = arith.constant 0 : index
      %c0_18 = arith.constant 0 : index
      %c0_19 = arith.constant 0 : index
      %33 = vector.load %arg6[%c0_17, %c0_18, %c0_19] : memref<1x8x1xf32, #tpu.memory_space<vmem>>, vector<1x8x1xf32>
      %34 = vector.shape_cast %33 : vector<1x8x1xf32> to vector<8x1xf32>
      %35 = arith.addf %21, %23 : vector<8x256xf32>
      %cst_20 = arith.constant dense<0.000000e+00> : vector<8xf32>
      %36 = vector.multi_reduction <add>, %35, %cst_20 [1] : vector<8x256xf32> to vector<8xf32>
      %37 = vector.shape_cast %36 : vector<8xf32> to vector<8x1xf32>
      %38 = arith.addf %34, %37 : vector<8x1xf32>
      %c0_21 = arith.constant 0 : index
      %c0_22 = arith.constant 0 : index
      %c0_23 = arith.constant 0 : index
      %39 = vector.load %arg6[%c0_21, %c0_22, %c0_23] : memref<1x8x1xf32, #tpu.memory_space<vmem>>, vector<1x8x1xf32>
      %40 = vector.shape_cast %39 : vector<1x8x1xf32> to vector<8x1xf32>
      %41 = vector.shape_cast %38 : vector<8x1xf32> to vector<1x8x1xf32>
      tpu.vector_store %arg6[%c0_21, %c0_22, %c0_23], %41 {strides = array<i32>} : memref<1x8x1xf32, #tpu.memory_space<vmem>>, vector<1x8x1xf32>,
    } else {
    }
    return
  }
  func.func @transform_0(%arg0: i32, %arg1: i32, %arg2: i32) -> (i32, i32) {
    %c1_i32 = arith.constant 1 : i32
    %0 = arith.muli %arg0, %c1_i32 : i32
    %1 = arith.addi %0, %arg2 : i32
    %c0_i32 = arith.constant 0 : i32
    %2 = arith.minsi %1, %c0_i32 : i32
    %c0_i32_0 = arith.constant 0 : i32
    return %arg1, %2 : i32, i32
  }
  func.func @transform_1(%arg0: i32, %arg1: i32, %arg2: i32) -> (i32, i32) {
    %c1_i32 = arith.constant 1 : i32
    %0 = arith.muli %arg0, %c1_i32 : i32
    %1 = arith.addi %0, %arg2 : i32
    %c0_i32 = arith.constant 0 : i32
    %2 = arith.minsi %1, %c0_i32 : i32
    %c0_i32_0 = arith.constant 0 : i32
    return %arg1, %2 : i32, i32
  }
  func.func @transform_2(%arg0: i32, %arg1: i32, %arg2: i32) -> (i32, i32, i32) {
    %c0_i32 = arith.constant 0 : i32
    %c0_i32_0 = arith.constant 0 : i32
    return %arg0, %arg1, %c0_i32 : i32, i32, i32
  }
  func.func @transform_3(%arg0: i32, %arg1: i32, %arg2: i32) -> (i32, i32, i32) {
    %c0_i32 = arith.constant 0 : i32
    %c0_i32_0 = arith.constant 0 : i32
    return %arg0, %arg1, %c0_i32 : i32, i32, i32
  }
}

</mosaic_0001>

<llo_original>
// kernel: tpu_custom_call.1
$region0: #{tpu_custom_call.1}
  #allocation0 [shape = 'u32[]', space=smem, size = 0x4, offset = 0x4, fixed_abs, tag = 'smem constant byte address 0x4 - core index']
  #allocation1 [shape = 'u32[72,128]{1,0:T(1,128)}', space=vmem, size = 0x9000, scoped, tag = 'internal scratch']
  %s0 = inlined_call_operand.hbm [shape: f32[8,256], index: 0, kind: input, shape index: {}]
  %s1 = inlined_call_operand.hbm [shape: f32[8,256], index: 1, kind: input, shape index: {}]
  %s2 = inlined_call_operand.vmem [shape: f32[1,8,1], index: 2, kind: output, shape index: {0}]
  %s3 = inlined_call_operand.vmem [shape: f32[1,8,1], index: 3, kind: output, shape index: {1}]
  %4 = xla_tuple %s2, %s3
  %s5 = sld [smem:[#allocation0]]
  $region46: #{tpu_custom_call.1} parent=0
    _
  %s7 = ssub.s32 1, %s5
  %s8 = scalar_select 0, %s7, %s5
  $region1: #{tpu_custom_call.1} parent=0
    #allocation2 [shape = 'u8[8192]{0}', space=vmem, size = 0x2000, scoped, tag = 'input window, operand 0, single buffered']
    #allocation3 [shape = 's32[1]{0}', space=sflag, size = 0x4, scoped, tag = 'scoped memory for tpu_custom_call.1']
    #allocation4 [shape = 'u8[8192]{0}', space=vmem, size = 0x2000, scoped, tag = 'input window, operand 1, single buffered']
    #allocation5 [shape = 's32[1]{0}', space=sflag, size = 0x4, scoped, tag = 'scoped memory for tpu_custom_call.1']
    %9 = vsyncpa [#allocation3], 0
    %10 = vsyncpa [#allocation5], 0
    // Predicated region
    $region2: #{tpu_custom_call.1} parent=1 // pred_check
      _
    $region3: #{tpu_custom_call.1} parent=1 // pred_check_branch
      %12 = sbr.rel (0) target = $region5
    $region4: #{tpu_custom_call.1} parent=1 // pred_region
      %s13 = sadd.s32 0, 0
      %p14 = scmp.lt.s32.totalorder %s13, 0
      %s15 = scalar_select %p14, %s13, 0
      %s16 = smul.u32 2, %s15
      %18 = vsyncadd [#allocation3], 0
      %s19 = smul.addr %s16, 8
      %s20 = scalar_lea.hbm %s0, %s19
      %s22 = sshll.u32 %s20, 4
      %s23 = int_to_ptr.hbm [resolvable:$true] %s22
      %s24 = sshll.u32 [#allocation2], 4
      %s25 = int_to_ptr.vmem [resolvable:$true] %s24
      %27 = dma.hbm_to_vmem [thread:$0]  %s23, 256, %s25, [#allocation3]
    $region5: #{tpu_custom_call.1} parent=1 // pred_fallthru
      _
    // Predicated region
    $region6: #{tpu_custom_call.1} parent=1 // pred_check
      _
    $region7: #{tpu_custom_call.1} parent=1 // pred_check_branch
      %29 = sbr.rel (0) target = $region9
    $region8: #{tpu_custom_call.1} parent=1 // pred_region
      %s30 = sadd.s32 0, 0
      %p31 = scmp.lt.s32.totalorder %s30, 0
      %s32 = scalar_select %p31, %s30, 0
      %s33 = smul.u32 2, %s32
      %35 = vsyncadd [#allocation5], 0
      %s36 = smul.addr %s33, 8
      %s37 = scalar_lea.hbm %s1, %s36
      %s39 = sshll.u32 %s37, 4
      %s40 = int_to_ptr.hbm [resolvable:$true] %s39
      %s41 = sshll.u32 [#allocation4], 4
      %s42 = int_to_ptr.vmem [resolvable:$true] %s41
      %44 = dma.hbm_to_vmem [thread:$0]  %s40, 256, %s42, [#allocation5]
    $region9: #{tpu_custom_call.1} parent=1 // pred_fallthru
      _
    // Predicated region
    $region10: #{tpu_custom_call.1} parent=1 // pred_check
      _
    $region11: #{tpu_custom_call.1} parent=1 // pred_check_branch
      %46 = sbr.rel (0) target = $region13
    $region12: #{tpu_custom_call.1} parent=1 // pred_region
      %48 = dma.done [#allocation3], 256
    $region13: #{tpu_custom_call.1} parent=1 // pred_fallthru
      _
    // Predicated region
    $region14: #{tpu_custom_call.1} parent=1 // pred_check
      _
    $region15: #{tpu_custom_call.1} parent=1 // pred_check_branch
      %50 = sbr.rel (0) target = $region17
    $region16: #{tpu_custom_call.1} parent=1 // pred_region
      %52 = dma.done [#allocation5], 256
    $region17: #{tpu_custom_call.1} parent=1 // pred_fallthru
      _
    %s53 = sadd.s32 0, 0
    %p54 = scmp.lt.s32.totalorder %s53, 0
    %s55 = scalar_select %p54, %s53, 0
    %s56 = smul.u32 2, %s55
    %s57 = sadd.s32 0, 0
    %p58 = scmp.lt.s32.totalorder %s57, 0
    %s59 = scalar_select %p58, %s57, 0
    %s60 = smul.u32 2, %s59
    %p61 = scmp.eq.s32.totalorder 0, 0
    // Predicated region
    $region18: #{tpu_custom_call.1} parent=1 // pred_check
      %p62 = pneg %p61
    $region19: #{tpu_custom_call.1} parent=1 // pred_check_branch
      %64 = sbr.rel (%p62) target = $region21
    $region20: #{tpu_custom_call.1} parent=1 // pred_region
      %vm65 = vcmask 7168
      %66 = vst.msk [vmem:[%s2] sm:$0xff] %vm65, 0.0
      %67 = vst.msk [vmem:[%s3] sm:$0xff] %vm65, 0.0
    $region21: #{tpu_custom_call.1} parent=1 // pred_fallthru
      _
    %v68 = vld [vmem:[#allocation2] sm:$0xff]
    %v69 = vld [vmem:[#allocation2 + $0x8] sm:$0xff]
    %v70 = vld [vmem:[#allocation4] sm:$0xff]
    %v71 = vld [vmem:[#allocation4 + $0x8] sm:$0xff]
    %s72 = sadd.s32 0, 0
    %s73 = smul.u32 %s72, 256
    %s74 = sadd.s32 %s73, 256
    %p75 = scmp.gt.s32.totalorder %s74, 256
    %p76 = scmp.le.s32.totalorder %s74, 256
    // Predicated region
    $region22: #{tpu_custom_call.1} parent=1 // pred_check
      %p77 = pneg %p76
    $region23: #{tpu_custom_call.1} parent=1 // pred_check_branch
      %79 = sbr.rel (%p77) target = $region25
    $region24: #{tpu_custom_call.1} parent=1 // pred_region
      %v80 = vld [vmem:[%s2] sm:$0xff]
      %v81 = vmul.f32 %v68, %v70
      %v82 = vmul.f32 %v69, %v71
      %v83 = vadd.f32 %v81, %v82
      %84 = vadd.xlane.f32.xlu0 %v83
      %v85 = vpop.xlane.xlu0 %84
      %v86 = vadd.f32 %v80, %v85
      %vm87 = vcmask 7168
      %88 = vst.msk [vmem:[%s2] sm:$0xff] %vm87, %v86
      %v89 = vld [vmem:[%s3] sm:$0xff]
      %v90 = vadd.f32 %v68, %v70
      %v91 = vadd.f32 %v69, %v71
      %v92 = vadd.f32 %v90, %v91
      %93 = vadd.xlane.f32.xlu0 %v92
      %v94 = vpop.xlane.xlu0 %93
      %v95 = vadd.f32 %v89, %v94
      %96 = vst.msk [vmem:[%s3] sm:$0xff] %vm87, %v95
    $region25: #{tpu_custom_call.1} parent=1 // pred_fallthru
      _
    // Predicated region
    $region26: #{tpu_custom_call.1} parent=1 // pred_check
      %p97 = pneg %p75
    $region27: #{tpu_custom_call.1} parent=1 // pred_check_branch
      %99 = sbr.rel (%p97) target = $region29
    $region28: #{tpu_custom_call.1} parent=1 // pred_region
      %v100 = vlaneseq
      %v101 = vand.u32 %v100, 127
      %v102 = vadd.s32 %v101, 128
      %v103 = vstv %s73
      %v104 = vadd.s32 %v103, %v101
      %v105 = vadd.s32 %v103, %v102
      %vm106 = vcmp.lt.s32.totalorder %v104, 256
      %vm107 = vcmp.lt.s32.totalorder %v105, 256
      %v108 = vsel %vm106, %v68, 0.0
      %v109 = vsel %vm107, %v69, 0.0
      %v110 = vsel %vm106, %v70, 0.0
      %v111 = vsel %vm107, %v71, 0.0
      %v112 = vld [vmem:[%s2] sm:$0xff]
      %v113 = vmul.f32 %v108, %v110
      %v114 = vmul.f32 %v109, %v111
      %v115 = vadd.f32 %v113, %v114
      %116 = vadd.xlane.f32.xlu0 %v115
      %v117 = vpop.xlane.xlu0 %116
      %v118 = vadd.f32 %v112, %v117
      %vm119 = vcmask 7168
      %120 = vst.msk [vmem:[%s2] sm:$0xff] %vm119, %v118
      %v121 = vld [vmem:[%s3] sm:$0xff]
      %v122 = vadd.f32 %v108, %v110
      %v123 = vadd.f32 %v109, %v111
      %v124 = vadd.f32 %v122, %v123
      %125 = vadd.xlane.f32.xlu0 %v124
      %v126 = vpop.xlane.xlu0 %125
      %v127 = vadd.f32 %v121, %v126
      %128 = vst.msk [vmem:[%s3] sm:$0xff] %vm119, %v127
    $region29: #{tpu_custom_call.1} parent=1 // pred_fallthru
      _
    // Predicated region
    $region30: #{tpu_custom_call.1} parent=1 // pred_check
      _
    $region31: #{tpu_custom_call.1} parent=1 // pred_check_branch
      %130 = sbr.rel (0) target = $region33
    $region32: #{tpu_custom_call.1} parent=1 // pred_region
      _
    $region33: #{tpu_custom_call.1} parent=1 // pred_fallthru
      _
    // Predicated region
    $region34: #{tpu_custom_call.1} parent=1 // pred_check
      _
    $region35: #{tpu_custom_call.1} parent=1 // pred_check_branch
      %132 = sbr.rel (0) target = $region37
    $region36: #{tpu_custom_call.1} parent=1 // pred_region
      _
    $region37: #{tpu_custom_call.1} parent=1 // pred_fallthru
      _
    // Predicated region
    $region38: #{tpu_custom_call.1} parent=1 // pred_check
      _
    $region39: #{tpu_custom_call.1} parent=1 // pred_check_branch
      %134 = sbr.rel (0) target = $region41
    $region40: #{tpu_custom_call.1} parent=1 // pred_region
      _
    $region41: #{tpu_custom_call.1} parent=1 // pred_fallthru
      _
    // Predicated region
    $region42: #{tpu_custom_call.1} parent=1 // pred_check
      _
    $region43: #{tpu_custom_call.1} parent=1 // pred_check_branch
      %136 = sbr.rel (0) target = $region45
    $region44: #{tpu_custom_call.1} parent=1 // pred_region
      _
    $region45: #{tpu_custom_call.1} parent=1 // pred_fallthru
      _
    %137 = vsyncpa [#allocation3], 1
    %138 = vsyncpa [#allocation5], 1

</llo_original>
